<compile_context>
chip_gen: v5e
topology: v5e:2x2
jax: 0.10.0
libtpu: 0.0.40
codegen_flags: <defaults>
</compile_context>

<pallas_src>
import functools

import jax
import jax.numpy as jnp
from jax import lax
from jax.experimental import pallas as pl
from jax.experimental.pallas import tpu as pltpu


def _round_up(x, m):
    return (x + m - 1) // m * m


def _smcce_kernel(pred_ref, gpos_ref, out_ref, m_ref, s_ref, *,
                  epsilon, n_total, tn):
    """Grid = (row_blocks, n_blocks); reduction over the last grid axis.

    pred_ref: (TB, TN)  pred tile (native dtype; upcast fused into exp)
    gpos_ref: (TB, P)   gathered positive logits (resident across k)
    out_ref : (TB, 128) per-row loss broadcast across lanes (written at last k)
    m_ref   : (TB, 1)   running max   (online logsumexp)
    s_ref   : (TB, 1)   running sum   (online logsumexp)
    """
    k = pl.program_id(1)

    @pl.when(k == 0)
    def _():
        # Seed the online LSE with the appended zero logit: max=0, sum=exp(0)=1.
        m_ref[...] = jnp.zeros_like(m_ref)
        s_ref[...] = jnp.ones_like(s_ref)

    tile = pred_ref[...]                                      # (TB, TN) native
    if n_total % tn != 0:
        # Ragged last column tile: mask columns >= N with a huge negative so
        # they contribute exp(...) == 0. For non-last k the limit >= TN and
        # the where is an identity (one cheap VALU select per element).
        col = lax.broadcasted_iota(jnp.int32, tile.shape, 1)
        limit = n_total - k * tn
        tile = jnp.where(col < limit, tile, jnp.asarray(-1e30, tile.dtype))

    # Row max in the native dtype (bf16 VALU on v6e/v7x; exact for max).
    tile_max = jnp.max(tile, axis=-1, keepdims=True).astype(jnp.float32)
    m_old = m_ref[...]
    m_new = jnp.maximum(m_old, tile_max)
    s_ref[...] = (s_ref[...] * jnp.exp(m_old - m_new)
                  + jnp.sum(jnp.exp(tile.astype(jnp.float32) - m_new),
                            axis=-1, keepdims=True))
    m_ref[...] = m_new

    @pl.when(k == pl.num_programs(1) - 1)
    def _():
        all_loss = m_ref[...] + jnp.log(s_ref[...])           # (TB, 1)

        g = gpos_ref[...].astype(jnp.float32)                 # (TB, P)

        # pos_loss = logsumexp(concat([-g, 0]), axis=-1)
        neg_g = -g
        m_p = jnp.maximum(jnp.max(neg_g, axis=-1, keepdims=True), 0.0)
        s_p = (jnp.sum(jnp.exp(neg_g - m_p), axis=-1, keepdims=True)
               + jnp.exp(-m_p))
        pos_loss = m_p + jnp.log(s_p)                         # (TB, 1)

        # lse_g = logsumexp(g, axis=-1)
        m_g = jnp.max(g, axis=-1, keepdims=True)
        lse_g = m_g + jnp.log(jnp.sum(jnp.exp(g - m_g), axis=-1, keepdims=True))

        aux = jnp.clip(1.0 - jnp.exp(lse_g - all_loss), epsilon, 1.0)
        loss = pos_loss + all_loss + jnp.log(aux)             # (TB, 1)

        out_ref[...] = jnp.broadcast_to(loss, out_ref.shape)  # lane-dense slab


def sparse_multilabel_cce_pallas(pred_rows, gathered_rows, epsilon=1e-07):
    """pred_rows: [R, N] float, gathered_rows: [R, P] float -> [R] f32 loss."""
    R, N = pred_rows.shape
    P = gathered_rows.shape[-1]
    itemsize = jnp.dtype(pred_rows.dtype).itemsize

    # Lane tile: split N into <=8192-wide chunks, rounded up to 128 lanes.
    n_chunks = pl.cdiv(N, 8192)
    tn = _round_up(pl.cdiv(N, n_chunks), 128)

    # Row tile: up to 256 rows (multiple of 8); keep >= 2 row blocks when
    # possible so v7x's two TensorCores both get work on the parallel axis.
    tb = min(256, _round_up(R, 8))
    tb = min(tb, max(8, _round_up(pl.cdiv(R, 2), 8)))

    # Cap the pred tile at ~4 MiB so two pipeline buffers (+ output slab)
    # stay well under scoped VMEM on every generation.
    max_tile_bytes = 4 * 1024 * 1024
    while tb * tn * itemsize > max_tile_bytes and tn > 512:
        tn = _round_up(tn // 2, 128)
    while tb * tn * itemsize > max_tile_bytes and tb > 8:
        tb = _round_up(tb // 2, 8)

    grid = (pl.cdiv(R, tb), pl.cdiv(N, tn))
    cost = pl.CostEstimate(
        flops=3 * R * N,
        transcendentals=R * N,
        bytes_accessed=R * N * itemsize + R * P * itemsize + R * 128 * 4,
    )

    out = pl.pallas_call(
        functools.partial(_smcce_kernel, epsilon=epsilon, n_total=N, tn=tn),
        out_shape=jax.ShapeDtypeStruct((R, 128), jnp.float32),
        grid=grid,
        in_specs=[
            pl.BlockSpec((tb, tn), lambda i, k: (i, k)),
            pl.BlockSpec((tb, P), lambda i, k: (i, 0)),
        ],
        out_specs=pl.BlockSpec((tb, 128), lambda i, k: (i, 0)),
        scratch_shapes=[
            pltpu.VMEM((tb, 1), jnp.float32),   # running max
            pltpu.VMEM((tb, 1), jnp.float32),   # running sum
        ],
        compiler_params=pltpu.CompilerParams(
            dimension_semantics=("parallel", "arbitrary"),
            vmem_limit_bytes=32 * 1024 * 1024),
        cost_estimate=cost,
    )(pred_rows, gathered_rows)

    return out[:, 0]


def my_loss(y_preds, y_trues, epsilon=1e-07):
    """y_preds: list of [B, H, S, S] float; y_trues: list of [B, H, P, 2] int."""
    # TODO(synk): mask_zero=True branch of the base class is not implemented
    # (MyLoss uses the default mask_zero=False).
    loss_list = []
    for y_pred, y_true in zip(y_preds, y_trues):
        B, H, S, S2 = y_pred.shape
        N = S * S2
        # flatten (row, col) positive positions into class indices (matches
        # torch: y_true[...,0] * shape[2] + y_true[...,1])
        idx = (y_true[..., 0] * S + y_true[..., 1]).astype(jnp.int32)   # [B,H,P]
        y_pred_flat = y_pred.reshape(B, H, N)

        # Tiny gather of positive logits in plain JAX (B*H*P values).
        # index == N maps to the appended zero logit, matching torch.gather on
        # the zero-padded logits.
        safe_idx = jnp.clip(idx, 0, N - 1)
        g = jnp.take_along_axis(y_pred_flat, safe_idx, axis=-1)
        g = jnp.where(idx >= N, jnp.zeros_like(g), g)                   # [B,H,P]

        per_row = sparse_multilabel_cce_pallas(
            y_pred_flat.reshape(B * H, N),
            g.reshape(B * H, g.shape[-1]),
            epsilon)                                                    # [B*H]
        per_bh = per_row.reshape(B, H)
        loss_list.append(jnp.mean(jnp.sum(per_bh, axis=1)))
    return {
        "loss": sum(loss_list) / 3,
        "entity_loss": loss_list[0],
        "head_loss": loss_list[1],
        "tail_loss": loss_list[2],
    }


# ---------------- pure-JAX reference (mirrors the torch code) ----------------
def _ref_smcce(y_pred, y_true, epsilon=1e-07):
    zeros = jnp.zeros_like(y_pred[..., :1])
    y_pred_c = jnp.concatenate([y_pred, zeros], axis=-1)
    y_pos_2 = jnp.take_along_axis(y_pred_c, y_true, axis=-1)
    y_pos_1 = jnp.concatenate([y_pos_2, zeros], axis=-1)
    lse = jax.scipy.special.logsumexp
    pos_loss = lse(-y_pos_1, axis=-1)
    all_loss = lse(y_pred_c, axis=-1)
    aux = lse(y_pos_2, axis=-1) - all_loss
    aux = jnp.clip(1.0 - jnp.exp(aux), epsilon, 1.0)
    neg_loss = all_loss + jnp.log(aux)
    return pos_loss + neg_loss


def _ref_my_loss(y_preds, y_trues):
    loss_list = []
    for y_pred, y_true in zip(y_preds, y_trues):
        B, H, S, S2 = y_pred.shape
        yt = y_true[..., 0] * S + y_true[..., 1]
        yp = y_pred.reshape(B, H, S * S2)
        loss = jnp.mean(jnp.sum(_ref_smcce(yp, yt.astype(jnp.int32)), axis=1))
        loss_list.append(loss)
    return {
        "loss": sum(loss_list) / 3,
        "entity_loss": loss_list[0],
        "head_loss": loss_list[1],
        "tail_loss": loss_list[2],
    }


if __name__ == "__main__":
    key = jax.random.PRNGKey(0)
    B, H, S, P = 2, 4, 16, 8  # batch, heads, seq_len, num_positive

    y_preds, y_trues = [], []
    for i in range(3):
        key, k1, k2 = jax.random.split(key, 3)
        y_preds.append(jax.random.normal(k1, (B, H, S, S), dtype=jnp.float32))
        y_trues.append(jax.random.randint(k2, (B, H, P, 2), 0, S, dtype=jnp.int32))

    out = my_loss(y_preds, y_trues)
    out = jax.tree_util.tree_map(jax.block_until_ready, out)

    ref = _ref_my_loss(y_preds, y_trues)
    for name in ("loss", "entity_loss", "head_loss", "tail_loss"):
        assert jnp.allclose(out[name], ref[name], rtol=1e-4, atol=1e-4), (
            name, out[name], ref[name])

    # Secondary check: ragged shapes exercise the in-kernel column mask
    # (N = 17*17 = 289, not a multiple of the lane tile) and a partial row
    # block (R = B*H = 6 < 8).
    key, k1, k2 = jax.random.split(key, 3)
    B2, H2, S2, P2 = 2, 3, 17, 5
    yp = jax.random.normal(k1, (B2, H2, S2, S2), dtype=jnp.float32)
    yt = jax.random.randint(k2, (B2, H2, P2, 2), 0, S2, dtype=jnp.int32)
    idx = (yt[..., 0] * S2 + yt[..., 1]).astype(jnp.int32)
    ypf = yp.reshape(B2, H2, S2 * S2)
    g = jnp.take_along_axis(ypf, idx, axis=-1)
    got = sparse_multilabel_cce_pallas(ypf.reshape(B2 * H2, -1),
                                       g.reshape(B2 * H2, -1))
    got = jax.block_until_ready(got)
    want = _ref_smcce(ypf, idx).reshape(-1)
    assert jnp.allclose(got, want, rtol=1e-4, atol=1e-4), (got, want)

    print("KERNEL_OK")
</pallas_src>

<mosaic_0001>
module attributes {stable_mosaic.version = 11 : i64} {
  func.func @_smcce_kernel(%arg0: i32, %arg1: i32, %arg2: memref<8x256xf32, #tpu.memory_space<vmem>>, %arg3: memref<8x8xf32, #tpu.memory_space<vmem>>, %arg4: memref<8x128xf32, #tpu.memory_space<vmem>>, %arg5: memref<8x1xf32, #tpu.memory_space<vmem>>, %arg6: memref<8x1xf32, #tpu.memory_space<vmem>>) attributes {dimension_semantics = [#tpu.dimension_semantics<parallel>, #tpu.dimension_semantics<arbitrary>], iteration_bounds = array<i64: 1, 1>, scalar_prefetch = 0 : i64, scratch_operands = 2 : i64, tpu.core_type = #tpu.core_type<tc>, window_params = [{transform_indices = @transform_0, window_bounds = array<i64: 8, 256>}, {transform_indices = @transform_1, window_bounds = array<i64: 8, 8>}, {transform_indices = @transform_2, window_bounds = array<i64: 8, 128>}]} {
    %c0_i32 = arith.constant 0 : i32
    %0 = arith.cmpi eq, %arg1, %c0_i32 : i32
    %1 = arith.extui %0 : i1 to i32
    %c0_i32_0 = arith.constant 0 : i32
    %2 = arith.cmpi ne, %1, %c0_i32_0 : i32
    scf.if %2 {
      %cst_13 = arith.constant 0.000000e+00 : f32
      %23 = vector.broadcast %cst_13 : f32 to vector<8x1xf32>
      %c0_14 = arith.constant 0 : index
      %c0_15 = arith.constant 0 : index
      %24 = vector.load %arg5[%c0_14, %c0_15] : memref<8x1xf32, #tpu.memory_space<vmem>>, vector<8x1xf32>
      tpu.vector_store %arg5[%c0_14, %c0_15], %23 {strides = array<i32>} : memref<8x1xf32, #tpu.memory_space<vmem>>, vector<8x1xf32>,
      %cst_16 = arith.constant 1.000000e+00 : f32
      %25 = vector.broadcast %cst_16 : f32 to vector<8x1xf32>
      %c0_17 = arith.constant 0 : index
      %c0_18 = arith.constant 0 : index
      %26 = vector.load %arg6[%c0_17, %c0_18] : memref<8x1xf32, #tpu.memory_space<vmem>>, vector<8x1xf32>
      tpu.vector_store %arg6[%c0_17, %c0_18], %25 {strides = array<i32>} : memref<8x1xf32, #tpu.memory_space<vmem>>, vector<8x1xf32>,
    } else {
    }
    %c0 = arith.constant 0 : index
    %c0_1 = arith.constant 0 : index
    %3 = vector.load %arg2[%c0, %c0_1] : memref<8x256xf32, #tpu.memory_space<vmem>>, vector<8x256xf32>
    %cst = arith.constant dense<0xFF800000> : vector<8xf32>
    %4 = vector.multi_reduction <maximumf>, %3, %cst [1] : vector<8x256xf32> to vector<8xf32>
    %5 = vector.shape_cast %4 : vector<8xf32> to vector<8x1xf32>
    %c0_2 = arith.constant 0 : index
    %c0_3 = arith.constant 0 : index
    %6 = vector.load %arg5[%c0_2, %c0_3] : memref<8x1xf32, #tpu.memory_space<vmem>>, vector<8x1xf32>
    %7 = arith.maximumf %6, %5 : vector<8x1xf32>
    %c0_4 = arith.constant 0 : index
    %c0_5 = arith.constant 0 : index
    %8 = vector.load %arg6[%c0_4, %c0_5] : memref<8x1xf32, #tpu.memory_space<vmem>>, vector<8x1xf32>
    %9 = arith.subf %6, %7 : vector<8x1xf32>
    %10 = math.exp %9 : vector<8x1xf32>
    %11 = arith.mulf %8, %10 : vector<8x1xf32>
    %12 = vector.broadcast %7 : vector<8x1xf32> to vector<8x256xf32>
    %13 = arith.subf %3, %12 : vector<8x256xf32>
    %14 = math.exp %13 : vector<8x256xf32>
    %cst_6 = arith.constant dense<0.000000e+00> : vector<8xf32>
    %15 = vector.multi_reduction <add>, %14, %cst_6 [1] : vector<8x256xf32> to vector<8xf32>
    %16 = vector.shape_cast %15 : vector<8xf32> to vector<8x1xf32>
    %17 = arith.addf %11, %16 : vector<8x1xf32>
    %c0_7 = arith.constant 0 : index
    %c0_8 = arith.constant 0 : index
    %18 = vector.load %arg6[%c0_7, %c0_8] : memref<8x1xf32, #tpu.memory_space<vmem>>, vector<8x1xf32>
    tpu.vector_store %arg6[%c0_7, %c0_8], %17 {strides = array<i32>} : memref<8x1xf32, #tpu.memory_space<vmem>>, vector<8x1xf32>,
    %c0_9 = arith.constant 0 : index
    %c0_10 = arith.constant 0 : index
    %19 = vector.load %arg5[%c0_9, %c0_10] : memref<8x1xf32, #tpu.memory_space<vmem>>, vector<8x1xf32>
    tpu.vector_store %arg5[%c0_9, %c0_10], %7 {strides = array<i32>} : memref<8x1xf32, #tpu.memory_space<vmem>>, vector<8x1xf32>,
    %c0_i32_11 = arith.constant 0 : i32
    %20 = arith.cmpi eq, %arg1, %c0_i32_11 : i32
    %21 = arith.extui %20 : i1 to i32
    %c0_i32_12 = arith.constant 0 : i32
    %22 = arith.cmpi ne, %21, %c0_i32_12 : i32
    scf.if %22 {
      %c0_13 = arith.constant 0 : index
      %c0_14 = arith.constant 0 : index
      %23 = vector.load %arg5[%c0_13, %c0_14] : memref<8x1xf32, #tpu.memory_space<vmem>>, vector<8x1xf32>
      %c0_15 = arith.constant 0 : index
      %c0_16 = arith.constant 0 : index
      %24 = vector.load %arg6[%c0_15, %c0_16] : memref<8x1xf32, #tpu.memory_space<vmem>>, vector<8x1xf32>
      %25 = math.log %24 : vector<8x1xf32>
      %26 = arith.addf %23, %25 : vector<8x1xf32>
      %c0_17 = arith.constant 0 : index
      %c0_18 = arith.constant 0 : index
      %27 = vector.load %arg3[%c0_17, %c0_18] : memref<8x8xf32, #tpu.memory_space<vmem>>, vector<8x8xf32>
      %cst_19 = arith.constant 0.000000e+00 : f32
      %28 = vector.broadcast %cst_19 : f32 to vector<8x8xf32>
      %29 = arith.subf %28, %27 : vector<8x8xf32>
      %cst_20 = arith.constant dense<0xFF800000> : vector<8xf32>
      %30 = vector.multi_reduction <maximumf>, %29, %cst_20 [1] : vector<8x8xf32> to vector<8xf32>
      %31 = vector.shape_cast %30 : vector<8xf32> to vector<8x1xf32>
      %cst_21 = arith.constant 0.000000e+00 : f32
      %32 = vector.broadcast %cst_21 : f32 to vector<8x1xf32>
      %33 = arith.maximumf %31, %32 : vector<8x1xf32>
      %34 = vector.broadcast %33 : vector<8x1xf32> to vector<8x8xf32>
      %35 = arith.subf %29, %34 : vector<8x8xf32>
      %36 = math.exp %35 : vector<8x8xf32>
      %cst_22 = arith.constant dense<0.000000e+00> : vector<8xf32>
      %37 = vector.multi_reduction <add>, %36, %cst_22 [1] : vector<8x8xf32> to vector<8xf32>
      %38 = vector.shape_cast %37 : vector<8xf32> to vector<8x1xf32>
      %cst_23 = arith.constant 0.000000e+00 : f32
      %39 = vector.broadcast %cst_23 : f32 to vector<8x1xf32>
      %40 = arith.subf %39, %33 : vector<8x1xf32>
      %41 = math.exp %40 : vector<8x1xf32>
      %42 = arith.addf %38, %41 : vector<8x1xf32>
      %43 = math.log %42 : vector<8x1xf32>
      %44 = arith.addf %33, %43 : vector<8x1xf32>
      %cst_24 = arith.constant dense<0xFF800000> : vector<8xf32>
      %45 = vector.multi_reduction <maximumf>, %27, %cst_24 [1] : vector<8x8xf32> to vector<8xf32>
      %46 = vector.shape_cast %45 : vector<8xf32> to vector<8x1xf32>
      %47 = vector.broadcast %46 : vector<8x1xf32> to vector<8x8xf32>
      %48 = arith.subf %27, %47 : vector<8x8xf32>
      %49 = math.exp %48 : vector<8x8xf32>
      %cst_25 = arith.constant dense<0.000000e+00> : vector<8xf32>
      %50 = vector.multi_reduction <add>, %49, %cst_25 [1] : vector<8x8xf32> to vector<8xf32>
      %51 = vector.shape_cast %50 : vector<8xf32> to vector<8x1xf32>
      %52 = math.log %51 : vector<8x1xf32>
      %53 = arith.addf %46, %52 : vector<8x1xf32>
      %54 = arith.subf %53, %26 : vector<8x1xf32>
      %55 = math.exp %54 : vector<8x1xf32>
      %cst_26 = arith.constant 1.000000e+00 : f32
      %56 = vector.broadcast %cst_26 : f32 to vector<8x1xf32>
      %57 = arith.subf %56, %55 : vector<8x1xf32>
      %cst_27 = arith.constant 1.000000e-07 : f32
      %cst_28 = arith.constant 1.000000e+00 : f32
      %58 = vector.broadcast %cst_27 : f32 to vector<8x1xf32>
      %59 = arith.maximumf %58, %57 : vector<8x1xf32>
      %60 = vector.broadcast %cst_28 : f32 to vector<8x1xf32>
      %61 = arith.minimumf %60, %59 : vector<8x1xf32>
      %62 = arith.addf %44, %26 : vector<8x1xf32>
      %63 = math.log %61 : vector<8x1xf32>
      %64 = arith.addf %62, %63 : vector<8x1xf32>
      %65 = vector.shape_cast %64 : vector<8x1xf32> to vector<8x1xf32>
      %66 = vector.broadcast %65 : vector<8x1xf32> to vector<8x128xf32>
      %c0_29 = arith.constant 0 : index
      %c0_30 = arith.constant 0 : index
      %67 = vector.load %arg4[%c0_29, %c0_30] : memref<8x128xf32, #tpu.memory_space<vmem>>, vector<8x128xf32>
      tpu.vector_store %arg4[%c0_29, %c0_30], %66 {strides = array<i32>} : memref<8x128xf32, #tpu.memory_space<vmem>>, vector<8x128xf32>,
    } else {
    }
    return
  }
  func.func @transform_0(%arg0: i32, %arg1: i32) -> (i32, i32) {
    %c0_i32 = arith.constant 0 : i32
    return %arg0, %arg1 : i32, i32
  }
  func.func @transform_1(%arg0: i32, %arg1: i32) -> (i32, i32) {
    %c0_i32 = arith.constant 0 : i32
    %c0_i32_0 = arith.constant 0 : i32
    return %arg0, %c0_i32 : i32, i32
  }
  func.func @transform_2(%arg0: i32, %arg1: i32) -> (i32, i32) {
    %c0_i32 = arith.constant 0 : i32
    %c0_i32_0 = arith.constant 0 : i32
    return %arg0, %c0_i32 : i32, i32
  }
}

</mosaic_0001>

<llo_original>
// kernel: tpu_custom_call.1
$region0: #{tpu_custom_call.1}
  #allocation0 [shape = 'u32[]', space=smem, size = 0x4, offset = 0x4, fixed_abs, tag = 'smem constant byte address 0x4 - core index']
  #allocation1 [shape = 'u32[72,128]{1,0:T(1,128)}', space=vmem, size = 0x9000, scoped, tag = 'internal scratch']
  #allocation2 [shape = 'f32[8,1]{1,0:T(8,128)}', space=vmem, size = 0x1000, scoped, tag = 'scratch operand']
  #allocation3 [shape = 'f32[8,1]{1,0:T(8,128)}', space=vmem, size = 0x1000, scoped, tag = 'scratch operand']
  %s0 = inlined_call_operand.hbm [shape: f32[8,256], index: 0, kind: input, shape index: {}]
  %s1 = inlined_call_operand.hbm [shape: f32[8,8], index: 1, kind: input, shape index: {}]
  %s2 = inlined_call_operand.hbm [shape: f32[8,128], index: 2, kind: output, shape index: {}]
  %s3 = sld [smem:[#allocation0]]
  $region34: #{tpu_custom_call.1} parent=0
    _
  %s5 = ssub.s32 1, %s3
  %s6 = scalar_select 0, %s5, %s3
  $region1: #{tpu_custom_call.1} parent=0
    #allocation4 [shape = 'u8[8192]{0}', space=vmem, size = 0x2000, scoped, tag = 'input window, operand 0, single buffered']
    #allocation5 [shape = 's32[1]{0}', space=sflag, size = 0x4, scoped, tag = 'scoped memory for tpu_custom_call.1']
    #allocation6 [shape = 's32[1]{0}', space=sflag, size = 0x4, scoped, tag = 'scoped memory for tpu_custom_call.1']
    #allocation7 [shape = 'u8[4096]{0}', space=vmem, size = 0x1000, scoped, tag = 'input window, operand 1, single buffered']
    #allocation8 [shape = 's32[1]{0}', space=sflag, size = 0x4, scoped, tag = 'scoped memory for tpu_custom_call.1']
    #allocation9 [shape = 'u8[4096]{0}', space=vmem, size = 0x1000, scoped, tag = 'output window, operand 0, single buffered']
    %7 = vsyncpa [#allocation5], 0
    %8 = vsyncpa [#allocation8], 0
    %9 = vsyncpa [#allocation6], 0
    // Predicated region
    $region2: #{tpu_custom_call.1} parent=1 // pred_check
      _
    $region3: #{tpu_custom_call.1} parent=1 // pred_check_branch
      %11 = sbr.rel (0) target = $region5
    $region4: #{tpu_custom_call.1} parent=1 // pred_region
      %13 = vsyncadd [#allocation5], 0
      %s15 = sshll.u32 %s0, 4
      %s16 = int_to_ptr.hbm [resolvable:$true] %s15
      %s17 = sshll.u32 [#allocation4], 4
      %s18 = int_to_ptr.vmem [resolvable:$true] %s17
      %20 = dma.hbm_to_vmem [thread:$0]  %s16, 256, %s18, [#allocation5]
    $region5: #{tpu_custom_call.1} parent=1 // pred_fallthru
      _
    // Predicated region
    $region6: #{tpu_custom_call.1} parent=1 // pred_check
      _
    $region7: #{tpu_custom_call.1} parent=1 // pred_check_branch
      %22 = sbr.rel (0) target = $region9
    $region8: #{tpu_custom_call.1} parent=1 // pred_region
      %24 = vsyncadd [#allocation8], 0
      %s26 = sshll.u32 %s1, 4
      %s27 = int_to_ptr.hbm [resolvable:$true] %s26
      %s28 = sshll.u32 [#allocation7], 4
      %s29 = int_to_ptr.vmem [resolvable:$true] %s28
      %31 = dma.hbm_to_vmem [thread:$0]  %s27, 128, %s29, [#allocation8]
    $region9: #{tpu_custom_call.1} parent=1 // pred_fallthru
      _
    // Predicated region
    $region10: #{tpu_custom_call.1} parent=1 // pred_check
      _
    $region11: #{tpu_custom_call.1} parent=1 // pred_check_branch
      %33 = sbr.rel (0) target = $region13
    $region12: #{tpu_custom_call.1} parent=1 // pred_region
      %35 = dma.done [#allocation5], 256
    $region13: #{tpu_custom_call.1} parent=1 // pred_fallthru
      _
    // Predicated region
    $region14: #{tpu_custom_call.1} parent=1 // pred_check
      _
    $region15: #{tpu_custom_call.1} parent=1 // pred_check_branch
      %37 = sbr.rel (0) target = $region17
    $region16: #{tpu_custom_call.1} parent=1 // pred_region
      %39 = dma.done [#allocation8], 128
    $region17: #{tpu_custom_call.1} parent=1 // pred_fallthru
      _
    %p40 = scmp.eq.s32.totalorder 0, 0
    // Predicated region
    $region18: #{tpu_custom_call.1} parent=1 // pred_check
      %p41 = pneg %p40
    $region19: #{tpu_custom_call.1} parent=1 // pred_check_branch
      %43 = sbr.rel (%p41) target = $region21
    $region20: #{tpu_custom_call.1} parent=1 // pred_region
      %vm44 = vcmask 7168
      %45 = vst.msk [vmem:[#allocation2] sm:$0xff] %vm44, 0.0
      %46 = vst.msk [vmem:[#allocation3] sm:$0xff] %vm44, 1.0
    $region21: #{tpu_custom_call.1} parent=1 // pred_fallthru
      _
    %v47 = vld [vmem:[#allocation4] sm:$0xff]
    %v48 = vld [vmem:[#allocation4 + $0x8] sm:$0xff]
    %v49 = vmax.f32 %v47, %v48
    %50 = vmax.xlane.f32.xlu0 %v49
    %v51 = vpop.xlane.xlu0 %50
    %v52 = vld [vmem:[#allocation2] sm:$0xff]
    %v53 = vmax.f32 %v52, %v51
    %v54 = vld [vmem:[#allocation3] sm:$0xff]
    %v55 = vsub.f32 %v52, %v53
    %v56 = vmul.f32 %v55, 1.442695
    %v57 = vpow.pop %v56
    %v58 = vmul.f32 %v54, %v57
    %60 = vset.pattern.permute.xlu0 0
    %61 = vperm.xlu0 %60, %v53
    %v62 = vpop.permute.xlu0 %61
    %v64 = vsub.f32 %v47, %v62
    %v65 = vsub.f32 %v48, %v62
    %v66 = vmul.f32 %v64, 1.442695
    %v67 = vpow.pop %v66
    %v68 = vmul.f32 %v65, 1.442695
    %v69 = vpow.pop %v68
    %v70 = vadd.f32 %v67, %v69
    %71 = vadd.xlane.f32.xlu0 %v70
    %v72 = vpop.xlane.xlu0 %71
    %v73 = vadd.f32 %v58, %v72
    %vm74 = vcmask 7168
    %75 = vst.msk [vmem:[#allocation3] sm:$0xff] %vm74, %v73
    %76 = vst.msk [vmem:[#allocation2] sm:$0xff] %vm74, %v53
    // Predicated region
    $region22: #{tpu_custom_call.1} parent=1 // pred_check
      %p77 = pneg %p40
    $region23: #{tpu_custom_call.1} parent=1 // pred_check_branch
      %79 = sbr.rel (%p77) target = $region25
    $region24: #{tpu_custom_call.1} parent=1 // pred_region
      %v80 = vld [vmem:[#allocation2] sm:$0xff]
      %v81 = vld [vmem:[#allocation3] sm:$0xff]
      %v82 = vlog2.pop %v81
      %v83 = vmul.f32 %v82, 0.6931472
      %v84 = vadd.f32 %v80, %v83
      %v85 = vld [vmem:[#allocation7] sm:$0xff]
      %v86 = vsub.f32 0.0, %v85
      %vm87 = vcmask 64512
      %v88 = vsel %vm87, %v86, -inf
      %89 = vmax.xlane.f32.xlu0 %v88
      %v90 = vpop.xlane.xlu0 %89
      %v91 = vmax.f32 %v90, 0.0
      %v92 = vsub.f32 %v86, %v91
      %v93 = vmul.f32 %v92, 1.442695
      %v94 = vpow.pop %v93
      %v95 = vsel %vm87, %v94, 0.0
      %96 = vadd.xlane.f32.xlu0 %v95
      %v97 = vpop.xlane.xlu0 %96
      %v98 = vsub.f32 0.0, %v91
      %v99 = vmul.f32 %v98, 1.442695
      %v100 = vpow.pop %v99
      %v101 = vadd.f32 %v97, %v100
      %v102 = vlog2.pop %v101
      %v103 = vmul.f32 %v102, 0.6931472
      %v104 = vadd.f32 %v91, %v103
      %v105 = vsel %vm87, %v85, -inf
      %106 = vmax.xlane.f32.xlu0 %v105
      %v107 = vpop.xlane.xlu0 %106
      %v108 = vsub.f32 %v85, %v107
      %v109 = vmul.f32 %v108, 1.442695
      %v110 = vpow.pop %v109
      %v111 = vsel %vm87, %v110, 0.0
      %112 = vadd.xlane.f32.xlu0 %v111
      %v113 = vpop.xlane.xlu0 %112
      %v114 = vlog2.pop %v113
      %v115 = vmul.f32 %v114, 0.6931472
      %v116 = vadd.f32 %v107, %v115
      %v117 = vsub.f32 %v116, %v84
      %v118 = vmul.f32 %v117, 1.442695
      %v119 = vpow.pop %v118
      %v120 = vsub.f32 1.0, %v119
      %v121 = vmax.f32 %v120, 1e-07
      %v122 = vmin.f32 %v121, 1.0
      %v123 = vadd.f32 %v104, %v84
      %v124 = vlog2.pop %v122
      %v125 = vmul.f32 %v124, 0.6931472
      %v126 = vadd.f32 %v123, %v125
      %128 = vset.pattern.permute.xlu0 0
      %129 = vperm.xlu0 %128, %v126
      %v130 = vpop.permute.xlu0 %129
      %132 = vst [vmem:[#allocation9] sm:$0xff] %v130
    $region25: #{tpu_custom_call.1} parent=1 // pred_fallthru
      _
    // Predicated region
    $region26: #{tpu_custom_call.1} parent=1 // pred_check
      _
    $region27: #{tpu_custom_call.1} parent=1 // pred_check_branch
      %134 = sbr.rel (0) target = $region29
    $region28: #{tpu_custom_call.1} parent=1 // pred_region
      %136 = vsyncadd [#allocation6], 0
      %s138 = sshll.u32 [#allocation9], 4
      %s139 = int_to_ptr.vmem [resolvable:$true] %s138
      %s140 = sshll.u32 %s2, 4
      %s141 = int_to_ptr.hbm [resolvable:$true] %s140
      %143 = dma.vmem_to_hbm [thread:$0]  %s139, 128, %s141, [#allocation6]
    $region29: #{tpu_custom_call.1} parent=1 // pred_fallthru
      _
    // Predicated region
    $region30: #{tpu_custom_call.1} parent=1 // pred_check
      _
    $region31: #{tpu_custom_call.1} parent=1 // pred_check_branch
      %145 = sbr.rel (0) target = $region33
    $region32: #{tpu_custom_call.1} parent=1 // pred_region
      %147 = dma.done [#allocation6], 128
    $region33: #{tpu_custom_call.1} parent=1 // pred_fallthru
      _
    %148 = vsyncpa [#allocation5], 1
    %149 = vsyncpa [#allocation8], 1
    %150 = vsyncpa [#allocation6], 1

</llo_original>
